<compile_context>
chip_gen: v7x
topology: tpu7x:2x2x1
jax: 0.10.0
libtpu: 0.0.40
codegen_flags: <defaults>
</compile_context>

<pallas_src>
import functools

import jax
import jax.numpy as jnp
from jax import lax
from jax.experimental import pallas as pl
from jax.experimental.pallas import tpu as pltpu

EPS = 1e-8   # matches module-level `eps` and torch cosine_similarity eps
BIG = 1e9    # sentinel: masked triplets become <= -BIG + margin and die in the relu


def _triplet_loss_kernel(emb_ref, lab_col_ref, lab_row_ref, margin_ref,
                         out_ref,
                         dist_a_ref, dist_n_ref, acc_ref, cnt_ref,
                         *, B, KT, unroll):
    t = pl.program_id(0)

    # ---- one-time setup on the first grid step (dist matrix + folded masks) ----
    @pl.when(t == 0)
    def _init():
        margin = margin_ref[...]                                  # (1, 1) f32

        x = emb_ref[...]
        xf = x.astype(jnp.float32)
        sq = jnp.sum(xf * xf, axis=-1, keepdims=True)             # (B, 1) squared norms
        # NOTE: per-vector eps clamp; identical to torch's max(||xi||*||xj||, eps) for
        # non-degenerate embeddings.
        inv = lax.rsqrt(jnp.maximum(sq, EPS))                     # EUP rsqrt (free slot)
        xn = (xf * inv).astype(x.dtype)                           # bf16 stays bf16 for MXU
        sim = lax.dot_general(xn, xn, (((1,), (1,)), ((), ())),
                              preferred_element_type=jnp.float32)
        dist = 1.0 - sim                                          # (B, B), symmetric, f32

        lab_col = lab_col_ref[...]                                # (B, 1) int32
        lab_row = lab_row_ref[...]                                # (1, B) int32
        lab_eq = lab_col == lab_row                               # (B, B) bool
        ii = lax.broadcasted_iota(jnp.int32, (B, 1), 0)
        jj = lax.broadcasted_iota(jnp.int32, (1, B), 1)
        base = jnp.logical_and(lab_eq, ii != jj)                  # labels[i]==labels[j], i!=j

        # A[j, i] = d(i,j) + margin for valid anchor/positive pairs, else -BIG.
        dist_a_ref[...] = jnp.where(base, dist + margin, -BIG)

        # N[k, i] = d(i,k) where labels[i] != labels[k], else +BIG.  Pad rows (if any)
        # are +BIG so they contribute nothing.
        dist_n = jnp.where(lab_eq, BIG, dist)
        k_pad = dist_n_ref.shape[0]
        if k_pad > B:  # only traced when B is not a multiple of the k-tile
            dist_n = jnp.concatenate(
                [dist_n, jnp.full((k_pad - B, B), BIG, jnp.float32)], axis=0)
        dist_n_ref[...] = dist_n

        acc_ref[...] = jnp.zeros_like(acc_ref)
        cnt_ref[...] = jnp.zeros_like(cnt_ref)

    # ---- O(B^2) work per negative k; no in-loop cross-lane reductions ----
    dist_a = dist_a_ref[...]                                      # hoisted loop invariant
    k0 = t * KT

    def body(s, carry):
        row = dist_n_ref[pl.ds(k0 + s, 1), :]                     # (1, B): masked d(i, k)
        m = jnp.maximum(dist_a - row, 0.0)                        # relu(masked triplet loss)
        acc_ref[...] += m
        cnt_ref[...] += (m > EPS).astype(jnp.float32)
        return carry

    lax.fori_loop(0, KT, body, 0, unroll=unroll)

    # ---- single reduction + divide on the last grid step ----
    @pl.when(t == pl.num_programs(0) - 1)
    def _finalize():
        total = jnp.sum(acc_ref[...], keepdims=True)              # (1, 1)
        count = jnp.sum(cnt_ref[...], keepdims=True)              # (1, 1)
        out_ref[...] = total / (count + EPS)


@jax.jit
def batch_all_triplet_loss(embeddings, labels, margin):
    """Pallas implementation of BatchAllTtripletLoss.forward."""
    B, D = embeddings.shape
    lab = labels.astype(jnp.int32)
    lab_col = lab.reshape(B, 1)
    lab_row = lab.reshape(1, B)
    margin_arr = jnp.asarray(margin, jnp.float32).reshape(1, 1)

    # k-tiling: one grid step for small B, 128-wide tiles for large B.
    KT = B if B <= 128 else 128
    nk = pl.cdiv(B, KT)
    K_pad = nk * KT
    unroll = True if KT <= 16 else 8

    # Explicit VMEM budget (scratch + inputs + headroom), clamped for v7x's 64 MiB.
    ws_bytes = 4 * (B * D + 3 * B * B + K_pad * B)
    vmem_limit = int(min(max(2 * ws_bytes + (4 << 20), 16 << 20), 48 << 20))

    out = pl.pallas_call(
        functools.partial(_triplet_loss_kernel, B=B, KT=KT, unroll=unroll),
        out_shape=jax.ShapeDtypeStruct((1, 1), jnp.float32),
        grid=(nk,),
        in_specs=[
            pl.BlockSpec((B, D), lambda t: (0, 0)),
            pl.BlockSpec((B, 1), lambda t: (0, 0)),
            pl.BlockSpec((1, B), lambda t: (0, 0)),
            pl.BlockSpec((1, 1), lambda t: (0, 0)),
        ],
        out_specs=pl.BlockSpec((1, 1), lambda t: (0, 0)),
        scratch_shapes=[
            pltpu.VMEM((B, B), jnp.float32),       # A: masked d(i,j)+margin
            pltpu.VMEM((K_pad, B), jnp.float32),   # N: masked d(i,k)
            pltpu.VMEM((B, B), jnp.float32),       # sum accumulator
            pltpu.VMEM((B, B), jnp.float32),       # positive-count accumulator
        ],
        compiler_params=pltpu.CompilerParams(
            dimension_semantics=("arbitrary",),    # k is a reduction axis
            vmem_limit_bytes=vmem_limit,
        ),
    )(embeddings, lab_col, lab_row, margin_arr)
    return out[0, 0]


def _reference(embeddings, labels, margin):
    """Pure-JAX reference mirroring the PyTorch module exactly."""
    x = embeddings.astype(jnp.float32)
    B = x.shape[0]
    gram = x @ x.T
    n = jnp.sqrt(jnp.sum(x * x, axis=-1))
    sim = gram / jnp.maximum(n[:, None] * n[None, :], EPS)
    dist = 1.0 - sim
    tl = dist[:, :, None] - dist[:, None, :] + margin
    idx = jnp.arange(B)
    neq = idx[:, None] != idx[None, :]
    distinct = neq[:, :, None] & neq[:, None, :] & neq[None, :, :]
    leq = labels[None, :] == labels[:, None]
    valid = leq[:, :, None] & jnp.logical_not(leq[:, None, :])
    mask = (distinct & valid).astype(jnp.float32)
    tl = jnp.maximum(tl * mask, 0.0)
    npos = jnp.sum((tl > EPS).astype(jnp.float32))
    return jnp.sum(tl) / (npos + EPS)


if __name__ == "__main__":
    key = jax.random.PRNGKey(0)
    B, D = 8, 32
    margin = 0.5  # BatchAllTtripletLoss(margin=0.5)

    emb = jax.random.normal(key, (B, D), dtype=jnp.float32)
    labels = jnp.array([0, 1, 0, 1, 2, 2, 3, 0], dtype=jnp.int32)

    loss = batch_all_triplet_loss(emb, labels, margin)
    loss = jax.block_until_ready(loss)

    ref = _reference(emb, labels, margin)
    assert jnp.isfinite(loss), "loss is not finite"
    assert jnp.allclose(loss, ref, rtol=1e-5, atol=1e-5), (float(loss), float(ref))
    print("KERNEL_OK")
</pallas_src>

<mosaic_0001>
module attributes {stable_mosaic.version = 11 : i64} {
  func.func @_triplet_loss_kernel(%arg0: i32, %arg1: memref<8x32xf32, #tpu.memory_space<vmem>>, %arg2: memref<8x1xi32, #tpu.memory_space<vmem>>, %arg3: memref<1x8xi32, #tpu.memory_space<vmem>>, %arg4: memref<1x1xf32, #tpu.memory_space<vmem>>, %arg5: memref<1x1xf32, #tpu.memory_space<vmem>>, %arg6: memref<8x8xf32, #tpu.memory_space<vmem>>, %arg7: memref<8x8xf32, #tpu.memory_space<vmem>>, %arg8: memref<8x8xf32, #tpu.memory_space<vmem>>, %arg9: memref<8x8xf32, #tpu.memory_space<vmem>>) attributes {dimension_semantics = [#tpu.dimension_semantics<arbitrary>], iteration_bounds = array<i64: 1>, scalar_prefetch = 0 : i64, scratch_operands = 4 : i64, tpu.core_type = #tpu.core_type<tc>, window_params = [{pipeline_mode = #tpu.pipeline_mode<synchronous>, transform_indices = @transform_0, window_bounds = array<i64: 8, 32>}, {pipeline_mode = #tpu.pipeline_mode<synchronous>, transform_indices = @transform_1, window_bounds = array<i64: 8, 1>}, {pipeline_mode = #tpu.pipeline_mode<synchronous>, transform_indices = @transform_2, window_bounds = array<i64: 1, 8>}, {pipeline_mode = #tpu.pipeline_mode<synchronous>, transform_indices = @transform_3, window_bounds = array<i64: 1, 1>}, {pipeline_mode = #tpu.pipeline_mode<synchronous>, transform_indices = @transform_4, window_bounds = array<i64: 1, 1>}]} {
    %c0_i32 = arith.constant 0 : i32
    %0 = arith.cmpi eq, %arg0, %c0_i32 : i32
    %1 = arith.extui %0 : i1 to i32
    %c0_i32_0 = arith.constant 0 : i32
    %2 = arith.cmpi ne, %1, %c0_i32_0 : i32
    scf.if %2 {
      %c0_93 = arith.constant 0 : index
      %c0_94 = arith.constant 0 : index
      %144 = vector.load %arg4[%c0_93, %c0_94] : memref<1x1xf32, #tpu.memory_space<vmem>>, vector<1x1xf32>
      %c0_95 = arith.constant 0 : index
      %c0_96 = arith.constant 0 : index
      %145 = vector.load %arg1[%c0_95, %c0_96] : memref<8x32xf32, #tpu.memory_space<vmem>>, vector<8x32xf32>
      %146 = arith.mulf %145, %145 : vector<8x32xf32>
      %cst_97 = arith.constant dense<0.000000e+00> : vector<8xf32>
      %147 = vector.multi_reduction <add>, %146, %cst_97 [1] : vector<8x32xf32> to vector<8xf32>
      %148 = vector.shape_cast %147 : vector<8xf32> to vector<8x1xf32>
      %cst_98 = arith.constant 9.99999993E-9 : f32
      %149 = vector.broadcast %cst_98 : f32 to vector<8x1xf32>
      %150 = arith.maximumf %148, %149 : vector<8x1xf32>
      %151 = math.rsqrt %150 : vector<8x1xf32>
      %152 = vector.broadcast %151 : vector<8x1xf32> to vector<8x32xf32>
      %153 = arith.mulf %145, %152 : vector<8x32xf32>
      %cst_99 = arith.constant dense<0.000000e+00> : vector<8x8xf32>
      %154 = tpu.matmul %153, %153, %cst_99 {dimension_numbers = #tpu.dot_dimension_numbers<[1], [1], [0], [0], [0, 0, 1, 0], [], []>} : vector<8x32xf32>, vector<8x32xf32>, vector<8x8xf32> -> vector<8x8xf32>
      %cst_100 = arith.constant 1.000000e+00 : f32
      %155 = vector.broadcast %cst_100 : f32 to vector<8x8xf32>
      %156 = arith.subf %155, %154 : vector<8x8xf32>
      %c0_101 = arith.constant 0 : index
      %c0_102 = arith.constant 0 : index
      %157 = vector.load %arg2[%c0_101, %c0_102] : memref<8x1xi32, #tpu.memory_space<vmem>>, vector<8x1xi32>
      %c0_103 = arith.constant 0 : index
      %c0_104 = arith.constant 0 : index
      %158 = vector.load %arg3[%c0_103, %c0_104] : memref<1x8xi32, #tpu.memory_space<vmem>>, vector<1x8xi32>
      %159 = vector.broadcast %157 : vector<8x1xi32> to vector<8x8xi32>
      %160 = vector.broadcast %158 : vector<1x8xi32> to vector<8x8xi32>
      %161 = arith.cmpi eq, %159, %160 : vector<8x8xi32>
      %162 = tpu.iota {dimensions = array<i32: 0>} : vector<8x1xi32>
      %163 = tpu.iota {dimensions = array<i32: 1>} : vector<1x8xi32>
      %164 = vector.broadcast %162 : vector<8x1xi32> to vector<8x8xi32>
      %165 = vector.broadcast %163 : vector<1x8xi32> to vector<8x8xi32>
      %166 = arith.cmpi ne, %164, %165 : vector<8x8xi32>
      %167 = arith.andi %161, %166 : vector<8x8xi1>
      %168 = vector.broadcast %144 : vector<1x1xf32> to vector<8x8xf32>
      %169 = arith.addf %156, %168 : vector<8x8xf32>
      %cst_105 = arith.constant -1.000000e+09 : f32
      %170 = vector.broadcast %cst_105 : f32 to vector<8x8xf32>
      %171 = arith.select %167, %169, %170 : vector<8x8xi1>, vector<8x8xf32>
      %c0_106 = arith.constant 0 : index
      %c0_107 = arith.constant 0 : index
      %172 = vector.load %arg6[%c0_106, %c0_107] : memref<8x8xf32, #tpu.memory_space<vmem>>, vector<8x8xf32>
      tpu.vector_store %arg6[%c0_106, %c0_107], %171 {strides = array<i32>} : memref<8x8xf32, #tpu.memory_space<vmem>>, vector<8x8xf32>,
      %cst_108 = arith.constant 1.000000e+09 : f32
      %173 = vector.broadcast %cst_108 : f32 to vector<8x8xf32>
      %174 = arith.select %161, %173, %156 : vector<8x8xi1>, vector<8x8xf32>
      %c0_109 = arith.constant 0 : index
      %c0_110 = arith.constant 0 : index
      %175 = vector.load %arg7[%c0_109, %c0_110] : memref<8x8xf32, #tpu.memory_space<vmem>>, vector<8x8xf32>
      tpu.vector_store %arg7[%c0_109, %c0_110], %174 {strides = array<i32>} : memref<8x8xf32, #tpu.memory_space<vmem>>, vector<8x8xf32>,
      %cst_111 = arith.constant 0.000000e+00 : f32
      %176 = vector.broadcast %cst_111 : f32 to vector<8x8xf32>
      %c0_112 = arith.constant 0 : index
      %c0_113 = arith.constant 0 : index
      %177 = vector.load %arg8[%c0_112, %c0_113] : memref<8x8xf32, #tpu.memory_space<vmem>>, vector<8x8xf32>
      tpu.vector_store %arg8[%c0_112, %c0_113], %176 {strides = array<i32>} : memref<8x8xf32, #tpu.memory_space<vmem>>, vector<8x8xf32>,
      %cst_114 = arith.constant 0.000000e+00 : f32
      %178 = vector.broadcast %cst_114 : f32 to vector<8x8xf32>
      %c0_115 = arith.constant 0 : index
      %c0_116 = arith.constant 0 : index
      %179 = vector.load %arg9[%c0_115, %c0_116] : memref<8x8xf32, #tpu.memory_space<vmem>>, vector<8x8xf32>
      tpu.vector_store %arg9[%c0_115, %c0_116], %178 {strides = array<i32>} : memref<8x8xf32, #tpu.memory_space<vmem>>, vector<8x8xf32>,
    } else {
    }
    %c0 = arith.constant 0 : index
    %c0_1 = arith.constant 0 : index
    %3 = vector.load %arg6[%c0, %c0_1] : memref<8x8xf32, #tpu.memory_space<vmem>>, vector<8x8xf32>
    %c8_i32 = arith.constant 8 : i32
    %4 = arith.muli %arg0, %c8_i32 : i32
    %c0_i32_2 = arith.constant 0 : i32
    %5 = arith.addi %4, %c0_i32_2 : i32
    %6 = arith.index_cast %5 : i32 to index
    %c0_3 = arith.constant 0 : index
    %7 = vector.load %arg7[%6, %c0_3] : memref<8x8xf32, #tpu.memory_space<vmem>>, vector<1x8xf32>
    %8 = vector.broadcast %7 : vector<1x8xf32> to vector<8x8xf32>
    %9 = arith.subf %3, %8 : vector<8x8xf32>
    %cst = arith.constant 0.000000e+00 : f32
    %10 = vector.broadcast %cst : f32 to vector<8x8xf32>
    %11 = arith.maximumf %9, %10 : vector<8x8xf32>
    %c0_4 = arith.constant 0 : index
    %c0_5 = arith.constant 0 : index
    %12 = vector.load %arg8[%c0_4, %c0_5] : memref<8x8xf32, #tpu.memory_space<vmem>>, vector<8x8xf32>
    %13 = arith.addf %12, %11 : vector<8x8xf32>
    %c0_6 = arith.constant 0 : index
    %c0_7 = arith.constant 0 : index
    %14 = vector.load %arg8[%c0_6, %c0_7] : memref<8x8xf32, #tpu.memory_space<vmem>>, vector<8x8xf32>
    tpu.vector_store %arg8[%c0_6, %c0_7], %13 {strides = array<i32>} : memref<8x8xf32, #tpu.memory_space<vmem>>, vector<8x8xf32>,
    %c0_8 = arith.constant 0 : index
    %c0_9 = arith.constant 0 : index
    %15 = vector.load %arg9[%c0_8, %c0_9] : memref<8x8xf32, #tpu.memory_space<vmem>>, vector<8x8xf32>
    %cst_10 = arith.constant 9.99999993E-9 : f32
    %16 = vector.broadcast %cst_10 : f32 to vector<8x8xf32>
    %17 = arith.cmpf ogt, %11, %16 : vector<8x8xf32>
    %18 = arith.extui %17 : vector<8x8xi1> to vector<8x8xi32>
    %19 = arith.sitofp %18 : vector<8x8xi32> to vector<8x8xf32>
    %20 = arith.addf %15, %19 : vector<8x8xf32>
    %c0_11 = arith.constant 0 : index
    %c0_12 = arith.constant 0 : index
    %21 = vector.load %arg9[%c0_11, %c0_12] : memref<8x8xf32, #tpu.memory_space<vmem>>, vector<8x8xf32>
    tpu.vector_store %arg9[%c0_11, %c0_12], %20 {strides = array<i32>} : memref<8x8xf32, #tpu.memory_space<vmem>>, vector<8x8xf32>,
    %c1_i32 = arith.constant 1 : i32
    %22 = arith.addi %4, %c1_i32 : i32
    %23 = arith.index_cast %22 : i32 to index
    %c0_13 = arith.constant 0 : index
    %24 = vector.load %arg7[%23, %c0_13] : memref<8x8xf32, #tpu.memory_space<vmem>>, vector<1x8xf32>
    %25 = vector.broadcast %24 : vector<1x8xf32> to vector<8x8xf32>
    %26 = arith.subf %3, %25 : vector<8x8xf32>
    %cst_14 = arith.constant 0.000000e+00 : f32
    %27 = vector.broadcast %cst_14 : f32 to vector<8x8xf32>
    %28 = arith.maximumf %26, %27 : vector<8x8xf32>
    %c0_15 = arith.constant 0 : index
    %c0_16 = arith.constant 0 : index
    %29 = vector.load %arg8[%c0_15, %c0_16] : memref<8x8xf32, #tpu.memory_space<vmem>>, vector<8x8xf32>
    %30 = arith.addf %29, %28 : vector<8x8xf32>
    %c0_17 = arith.constant 0 : index
    %c0_18 = arith.constant 0 : index
    %31 = vector.load %arg8[%c0_17, %c0_18] : memref<8x8xf32, #tpu.memory_space<vmem>>, vector<8x8xf32>
    tpu.vector_store %arg8[%c0_17, %c0_18], %30 {strides = array<i32>} : memref<8x8xf32, #tpu.memory_space<vmem>>, vector<8x8xf32>,
    %c0_19 = arith.constant 0 : index
    %c0_20 = arith.constant 0 : index
    %32 = vector.load %arg9[%c0_19, %c0_20] : memref<8x8xf32, #tpu.memory_space<vmem>>, vector<8x8xf32>
    %cst_21 = arith.constant 9.99999993E-9 : f32
    %33 = vector.broadcast %cst_21 : f32 to vector<8x8xf32>
    %34 = arith.cmpf ogt, %28, %33 : vector<8x8xf32>
    %35 = arith.extui %34 : vector<8x8xi1> to vector<8x8xi32>
    %36 = arith.sitofp %35 : vector<8x8xi32> to vector<8x8xf32>
    %37 = arith.addf %32, %36 : vector<8x8xf32>
    %c0_22 = arith.constant 0 : index
    %c0_23 = arith.constant 0 : index
    %38 = vector.load %arg9[%c0_22, %c0_23] : memref<8x8xf32, #tpu.memory_space<vmem>>, vector<8x8xf32>
    tpu.vector_store %arg9[%c0_22, %c0_23], %37 {strides = array<i32>} : memref<8x8xf32, #tpu.memory_space<vmem>>, vector<8x8xf32>,
    %c2_i32 = arith.constant 2 : i32
    %39 = arith.addi %4, %c2_i32 : i32
    %40 = arith.index_cast %39 : i32 to index
    %c0_24 = arith.constant 0 : index
    %41 = vector.load %arg7[%40, %c0_24] : memref<8x8xf32, #tpu.memory_space<vmem>>, vector<1x8xf32>
    %42 = vector.broadcast %41 : vector<1x8xf32> to vector<8x8xf32>
    %43 = arith.subf %3, %42 : vector<8x8xf32>
    %cst_25 = arith.constant 0.000000e+00 : f32
    %44 = vector.broadcast %cst_25 : f32 to vector<8x8xf32>
    %45 = arith.maximumf %43, %44 : vector<8x8xf32>
    %c0_26 = arith.constant 0 : index
    %c0_27 = arith.constant 0 : index
    %46 = vector.load %arg8[%c0_26, %c0_27] : memref<8x8xf32, #tpu.memory_space<vmem>>, vector<8x8xf32>
    %47 = arith.addf %46, %45 : vector<8x8xf32>
    %c0_28 = arith.constant 0 : index
    %c0_29 = arith.constant 0 : index
    %48 = vector.load %arg8[%c0_28, %c0_29] : memref<8x8xf32, #tpu.memory_space<vmem>>, vector<8x8xf32>
    tpu.vector_store %arg8[%c0_28, %c0_29], %47 {strides = array<i32>} : memref<8x8xf32, #tpu.memory_space<vmem>>, vector<8x8xf32>,
    %c0_30 = arith.constant 0 : index
    %c0_31 = arith.constant 0 : index
    %49 = vector.load %arg9[%c0_30, %c0_31] : memref<8x8xf32, #tpu.memory_space<vmem>>, vector<8x8xf32>
    %cst_32 = arith.constant 9.99999993E-9 : f32
    %50 = vector.broadcast %cst_32 : f32 to vector<8x8xf32>
    %51 = arith.cmpf ogt, %45, %50 : vector<8x8xf32>
    %52 = arith.extui %51 : vector<8x8xi1> to vector<8x8xi32>
    %53 = arith.sitofp %52 : vector<8x8xi32> to vector<8x8xf32>
    %54 = arith.addf %49, %53 : vector<8x8xf32>
    %c0_33 = arith.constant 0 : index
    %c0_34 = arith.constant 0 : index
    %55 = vector.load %arg9[%c0_33, %c0_34] : memref<8x8xf32, #tpu.memory_space<vmem>>, vector<8x8xf32>
    tpu.vector_store %arg9[%c0_33, %c0_34], %54 {strides = array<i32>} : memref<8x8xf32, #tpu.memory_space<vmem>>, vector<8x8xf32>,
    %c3_i32 = arith.constant 3 : i32
    %56 = arith.addi %4, %c3_i32 : i32
    %57 = arith.index_cast %56 : i32 to index
    %c0_35 = arith.constant 0 : index
    %58 = vector.load %arg7[%57, %c0_35] : memref<8x8xf32, #tpu.memory_space<vmem>>, vector<1x8xf32>
    %59 = vector.broadcast %58 : vector<1x8xf32> to vector<8x8xf32>
    %60 = arith.subf %3, %59 : vector<8x8xf32>
    %cst_36 = arith.constant 0.000000e+00 : f32
    %61 = vector.broadcast %cst_36 : f32 to vector<8x8xf32>
    %62 = arith.maximumf %60, %61 : vector<8x8xf32>
    %c0_37 = arith.constant 0 : index
    %c0_38 = arith.constant 0 : index
    %63 = vector.load %arg8[%c0_37, %c0_38] : memref<8x8xf32, #tpu.memory_space<vmem>>, vector<8x8xf32>
    %64 = arith.addf %63, %62 : vector<8x8xf32>
    %c0_39 = arith.constant 0 : index
    %c0_40 = arith.constant 0 : index
    %65 = vector.load %arg8[%c0_39, %c0_40] : memref<8x8xf32, #tpu.memory_space<vmem>>, vector<8x8xf32>
    tpu.vector_store %arg8[%c0_39, %c0_40], %64 {strides = array<i32>} : memref<8x8xf32, #tpu.memory_space<vmem>>, vector<8x8xf32>,
    %c0_41 = arith.constant 0 : index
    %c0_42 = arith.constant 0 : index
    %66 = vector.load %arg9[%c0_41, %c0_42] : memref<8x8xf32, #tpu.memory_space<vmem>>, vector<8x8xf32>
    %cst_43 = arith.constant 9.99999993E-9 : f32
    %67 = vector.broadcast %cst_43 : f32 to vector<8x8xf32>
    %68 = arith.cmpf ogt, %62, %67 : vector<8x8xf32>
    %69 = arith.extui %68 : vector<8x8xi1> to vector<8x8xi32>
    %70 = arith.sitofp %69 : vector<8x8xi32> to vector<8x8xf32>
    %71 = arith.addf %66, %70 : vector<8x8xf32>
    %c0_44 = arith.constant 0 : index
    %c0_45 = arith.constant 0 : index
    %72 = vector.load %arg9[%c0_44, %c0_45] : memref<8x8xf32, #tpu.memory_space<vmem>>, vector<8x8xf32>
    tpu.vector_store %arg9[%c0_44, %c0_45], %71 {strides = array<i32>} : memref<8x8xf32, #tpu.memory_space<vmem>>, vector<8x8xf32>,
    %c4_i32 = arith.constant 4 : i32
    %73 = arith.addi %4, %c4_i32 : i32
    %74 = arith.index_cast %73 : i32 to index
    %c0_46 = arith.constant 0 : index
    %75 = vector.load %arg7[%74, %c0_46] : memref<8x8xf32, #tpu.memory_space<vmem>>, vector<1x8xf32>
    %76 = vector.broadcast %75 : vector<1x8xf32> to vector<8x8xf32>
    %77 = arith.subf %3, %76 : vector<8x8xf32>
    %cst_47 = arith.constant 0.000000e+00 : f32
    %78 = vector.broadcast %cst_47 : f32 to vector<8x8xf32>
    %79 = arith.maximumf %77, %78 : vector<8x8xf32>
    %c0_48 = arith.constant 0 : index
    %c0_49 = arith.constant 0 : index
    %80 = vector.load %arg8[%c0_48, %c0_49] : memref<8x8xf32, #tpu.memory_space<vmem>>, vector<8x8xf32>
    %81 = arith.addf %80, %79 : vector<8x8xf32>
    %c0_50 = arith.constant 0 : index
    %c0_51 = arith.constant 0 : index
    %82 = vector.load %arg8[%c0_50, %c0_51] : memref<8x8xf32, #tpu.memory_space<vmem>>, vector<8x8xf32>
    tpu.vector_store %arg8[%c0_50, %c0_51], %81 {strides = array<i32>} : memref<8x8xf32, #tpu.memory_space<vmem>>, vector<8x8xf32>,
    %c0_52 = arith.constant 0 : index
    %c0_53 = arith.constant 0 : index
    %83 = vector.load %arg9[%c0_52, %c0_53] : memref<8x8xf32, #tpu.memory_space<vmem>>, vector<8x8xf32>
    %cst_54 = arith.constant 9.99999993E-9 : f32
    %84 = vector.broadcast %cst_54 : f32 to vector<8x8xf32>
    %85 = arith.cmpf ogt, %79, %84 : vector<8x8xf32>
    %86 = arith.extui %85 : vector<8x8xi1> to vector<8x8xi32>
    %87 = arith.sitofp %86 : vector<8x8xi32> to vector<8x8xf32>
    %88 = arith.addf %83, %87 : vector<8x8xf32>
    %c0_55 = arith.constant 0 : index
    %c0_56 = arith.constant 0 : index
    %89 = vector.load %arg9[%c0_55, %c0_56] : memref<8x8xf32, #tpu.memory_space<vmem>>, vector<8x8xf32>
    tpu.vector_store %arg9[%c0_55, %c0_56], %88 {strides = array<i32>} : memref<8x8xf32, #tpu.memory_space<vmem>>, vector<8x8xf32>,
    %c5_i32 = arith.constant 5 : i32
    %90 = arith.addi %4, %c5_i32 : i32
    %91 = arith.index_cast %90 : i32 to index
    %c0_57 = arith.constant 0 : index
    %92 = vector.load %arg7[%91, %c0_57] : memref<8x8xf32, #tpu.memory_space<vmem>>, vector<1x8xf32>
    %93 = vector.broadcast %92 : vector<1x8xf32> to vector<8x8xf32>
    %94 = arith.subf %3, %93 : vector<8x8xf32>
    %cst_58 = arith.constant 0.000000e+00 : f32
    %95 = vector.broadcast %cst_58 : f32 to vector<8x8xf32>
    %96 = arith.maximumf %94, %95 : vector<8x8xf32>
    %c0_59 = arith.constant 0 : index
    %c0_60 = arith.constant 0 : index
    %97 = vector.load %arg8[%c0_59, %c0_60] : memref<8x8xf32, #tpu.memory_space<vmem>>, vector<8x8xf32>
    %98 = arith.addf %97, %96 : vector<8x8xf32>
    %c0_61 = arith.constant 0 : index
    %c0_62 = arith.constant 0 : index
    %99 = vector.load %arg8[%c0_61, %c0_62] : memref<8x8xf32, #tpu.memory_space<vmem>>, vector<8x8xf32>
    tpu.vector_store %arg8[%c0_61, %c0_62], %98 {strides = array<i32>} : memref<8x8xf32, #tpu.memory_space<vmem>>, vector<8x8xf32>,
    %c0_63 = arith.constant 0 : index
    %c0_64 = arith.constant 0 : index
    %100 = vector.load %arg9[%c0_63, %c0_64] : memref<8x8xf32, #tpu.memory_space<vmem>>, vector<8x8xf32>
    %cst_65 = arith.constant 9.99999993E-9 : f32
    %101 = vector.broadcast %cst_65 : f32 to vector<8x8xf32>
    %102 = arith.cmpf ogt, %96, %101 : vector<8x8xf32>
    %103 = arith.extui %102 : vector<8x8xi1> to vector<8x8xi32>
    %104 = arith.sitofp %103 : vector<8x8xi32> to vector<8x8xf32>
    %105 = arith.addf %100, %104 : vector<8x8xf32>
    %c0_66 = arith.constant 0 : index
    %c0_67 = arith.constant 0 : index
    %106 = vector.load %arg9[%c0_66, %c0_67] : memref<8x8xf32, #tpu.memory_space<vmem>>, vector<8x8xf32>
    tpu.vector_store %arg9[%c0_66, %c0_67], %105 {strides = array<i32>} : memref<8x8xf32, #tpu.memory_space<vmem>>, vector<8x8xf32>,
    %c6_i32 = arith.constant 6 : i32
    %107 = arith.addi %4, %c6_i32 : i32
    %108 = arith.index_cast %107 : i32 to index
    %c0_68 = arith.constant 0 : index
    %109 = vector.load %arg7[%108, %c0_68] : memref<8x8xf32, #tpu.memory_space<vmem>>, vector<1x8xf32>
    %110 = vector.broadcast %109 : vector<1x8xf32> to vector<8x8xf32>
    %111 = arith.subf %3, %110 : vector<8x8xf32>
    %cst_69 = arith.constant 0.000000e+00 : f32
    %112 = vector.broadcast %cst_69 : f32 to vector<8x8xf32>
    %113 = arith.maximumf %111, %112 : vector<8x8xf32>
    %c0_70 = arith.constant 0 : index
    %c0_71 = arith.constant 0 : index
    %114 = vector.load %arg8[%c0_70, %c0_71] : memref<8x8xf32, #tpu.memory_space<vmem>>, vector<8x8xf32>
    %115 = arith.addf %114, %113 : vector<8x8xf32>
    %c0_72 = arith.constant 0 : index
    %c0_73 = arith.constant 0 : index
    %116 = vector.load %arg8[%c0_72, %c0_73] : memref<8x8xf32, #tpu.memory_space<vmem>>, vector<8x8xf32>
    tpu.vector_store %arg8[%c0_72, %c0_73], %115 {strides = array<i32>} : memref<8x8xf32, #tpu.memory_space<vmem>>, vector<8x8xf32>,
    %c0_74 = arith.constant 0 : index
    %c0_75 = arith.constant 0 : index
    %117 = vector.load %arg9[%c0_74, %c0_75] : memref<8x8xf32, #tpu.memory_space<vmem>>, vector<8x8xf32>
    %cst_76 = arith.constant 9.99999993E-9 : f32
    %118 = vector.broadcast %cst_76 : f32 to vector<8x8xf32>
    %119 = arith.cmpf ogt, %113, %118 : vector<8x8xf32>
    %120 = arith.extui %119 : vector<8x8xi1> to vector<8x8xi32>
    %121 = arith.sitofp %120 : vector<8x8xi32> to vector<8x8xf32>
    %122 = arith.addf %117, %121 : vector<8x8xf32>
    %c0_77 = arith.constant 0 : index
    %c0_78 = arith.constant 0 : index
    %123 = vector.load %arg9[%c0_77, %c0_78] : memref<8x8xf32, #tpu.memory_space<vmem>>, vector<8x8xf32>
    tpu.vector_store %arg9[%c0_77, %c0_78], %122 {strides = array<i32>} : memref<8x8xf32, #tpu.memory_space<vmem>>, vector<8x8xf32>,
    %c7_i32 = arith.constant 7 : i32
    %124 = arith.addi %4, %c7_i32 : i32
    %125 = arith.index_cast %124 : i32 to index
    %c0_79 = arith.constant 0 : index
    %126 = vector.load %arg7[%125, %c0_79] : memref<8x8xf32, #tpu.memory_space<vmem>>, vector<1x8xf32>
    %127 = vector.broadcast %126 : vector<1x8xf32> to vector<8x8xf32>
    %128 = arith.subf %3, %127 : vector<8x8xf32>
    %cst_80 = arith.constant 0.000000e+00 : f32
    %129 = vector.broadcast %cst_80 : f32 to vector<8x8xf32>
    %130 = arith.maximumf %128, %129 : vector<8x8xf32>
    %c0_81 = arith.constant 0 : index
    %c0_82 = arith.constant 0 : index
    %131 = vector.load %arg8[%c0_81, %c0_82] : memref<8x8xf32, #tpu.memory_space<vmem>>, vector<8x8xf32>
    %132 = arith.addf %131, %130 : vector<8x8xf32>
    %c0_83 = arith.constant 0 : index
    %c0_84 = arith.constant 0 : index
    %133 = vector.load %arg8[%c0_83, %c0_84] : memref<8x8xf32, #tpu.memory_space<vmem>>, vector<8x8xf32>
    tpu.vector_store %arg8[%c0_83, %c0_84], %132 {strides = array<i32>} : memref<8x8xf32, #tpu.memory_space<vmem>>, vector<8x8xf32>,
    %c0_85 = arith.constant 0 : index
    %c0_86 = arith.constant 0 : index
    %134 = vector.load %arg9[%c0_85, %c0_86] : memref<8x8xf32, #tpu.memory_space<vmem>>, vector<8x8xf32>
    %cst_87 = arith.constant 9.99999993E-9 : f32
    %135 = vector.broadcast %cst_87 : f32 to vector<8x8xf32>
    %136 = arith.cmpf ogt, %130, %135 : vector<8x8xf32>
    %137 = arith.extui %136 : vector<8x8xi1> to vector<8x8xi32>
    %138 = arith.sitofp %137 : vector<8x8xi32> to vector<8x8xf32>
    %139 = arith.addf %134, %138 : vector<8x8xf32>
    %c0_88 = arith.constant 0 : index
    %c0_89 = arith.constant 0 : index
    %140 = vector.load %arg9[%c0_88, %c0_89] : memref<8x8xf32, #tpu.memory_space<vmem>>, vector<8x8xf32>
    tpu.vector_store %arg9[%c0_88, %c0_89], %139 {strides = array<i32>} : memref<8x8xf32, #tpu.memory_space<vmem>>, vector<8x8xf32>,
    %c8_i32_90 = arith.constant 8 : i32
    %c0_i32_91 = arith.constant 0 : i32
    %141 = arith.cmpi eq, %arg0, %c0_i32_91 : i32
    %142 = arith.extui %141 : i1 to i32
    %c0_i32_92 = arith.constant 0 : i32
    %143 = arith.cmpi ne, %142, %c0_i32_92 : i32
    scf.if %143 {
      %c0_93 = arith.constant 0 : index
      %c0_94 = arith.constant 0 : index
      %144 = vector.load %arg8[%c0_93, %c0_94] : memref<8x8xf32, #tpu.memory_space<vmem>>, vector<8x8xf32>
      %145 = vector.shape_cast %144 : vector<8x8xf32> to vector<1x8x8xf32>
      %cst_95 = arith.constant dense<0.000000e+00> : vector<1xf32>
      %146 = vector.multi_reduction <add>, %145, %cst_95 [1, 2] : vector<1x8x8xf32> to vector<1xf32>
      %147 = vector.shape_cast %146 : vector<1xf32> to vector<1x1x1xf32>
      %148 = vector.extract %147[0, 0, 0] : f32 from vector<1x1x1xf32>
      %149 = vector.broadcast %148 : f32 to vector<1x1xf32>
      %c0_96 = arith.constant 0 : index
      %c0_97 = arith.constant 0 : index
      %150 = vector.load %arg9[%c0_96, %c0_97] : memref<8x8xf32, #tpu.memory_space<vmem>>, vector<8x8xf32>
      %151 = vector.shape_cast %150 : vector<8x8xf32> to vector<1x8x8xf32>
      %cst_98 = arith.constant dense<0.000000e+00> : vector<1xf32>
      %152 = vector.multi_reduction <add>, %151, %cst_98 [1, 2] : vector<1x8x8xf32> to vector<1xf32>
      %153 = vector.shape_cast %152 : vector<1xf32> to vector<1x1x1xf32>
      %154 = vector.extract %153[0, 0, 0] : f32 from vector<1x1x1xf32>
      %155 = vector.broadcast %154 : f32 to vector<1x1xf32>
      %cst_99 = arith.constant 9.99999993E-9 : f32
      %156 = vector.broadcast %cst_99 : f32 to vector<1x1xf32>
      %157 = arith.addf %155, %156 : vector<1x1xf32>
      %158 = arith.divf %149, %157 : vector<1x1xf32>
      %c0_100 = arith.constant 0 : index
      %c0_101 = arith.constant 0 : index
      %159 = vector.load %arg5[%c0_100, %c0_101] : memref<1x1xf32, #tpu.memory_space<vmem>>, vector<1x1xf32>
      tpu.vector_store %arg5[%c0_100, %c0_101], %158 {strides = array<i32>} : memref<1x1xf32, #tpu.memory_space<vmem>>, vector<1x1xf32>,
    } else {
    }
    return
  }
  func.func @transform_0(%arg0: i32) -> (i32, i32) {
    %c0_i32 = arith.constant 0 : i32
    %c0_i32_0 = arith.constant 0 : i32
    %c0_i32_1 = arith.constant 0 : i32
    return %c0_i32, %c0_i32_0 : i32, i32
  }
  func.func @transform_1(%arg0: i32) -> (i32, i32) {
    %c0_i32 = arith.constant 0 : i32
    %c0_i32_0 = arith.constant 0 : i32
    %c0_i32_1 = arith.constant 0 : i32
    return %c0_i32, %c0_i32_0 : i32, i32
  }
  func.func @transform_2(%arg0: i32) -> (i32, i32) {
    %c0_i32 = arith.constant 0 : i32
    %c0_i32_0 = arith.constant 0 : i32
    %c0_i32_1 = arith.constant 0 : i32
    return %c0_i32, %c0_i32_0 : i32, i32
  }
  func.func @transform_3(%arg0: i32) -> (i32, i32) {
    %c0_i32 = arith.constant 0 : i32
    %c0_i32_0 = arith.constant 0 : i32
    %c0_i32_1 = arith.constant 0 : i32
    return %c0_i32, %c0_i32_0 : i32, i32
  }
  func.func @transform_4(%arg0: i32) -> (i32, i32) {
    %c0_i32 = arith.constant 0 : i32
    %c0_i32_0 = arith.constant 0 : i32
    %c0_i32_1 = arith.constant 0 : i32
    return %c0_i32, %c0_i32_0 : i32, i32
  }
}

</mosaic_0001>

<llo_original>
// kernel: batch_all_triplet_loss.1
$region0: #{batch_all_triplet_loss.1}
  #allocation0 [shape = 'u32[]', space=smem, size = 0x4, offset = 0x4, fixed_abs, tag = 'smem constant byte address 0x4 - core index']
  #allocation1 [shape = 'u32[144,128]{1,0:T(1,128)}', space=vmem, size = 0x12000, scoped, tag = 'internal scratch']
  #allocation2 [shape = 'f32[8,8]{1,0:T(8,128)}', space=vmem, size = 0x1000, scoped, tag = 'scratch operand']
  #allocation3 [shape = 'f32[8,8]{1,0:T(8,128)}', space=vmem, size = 0x1000, scoped, tag = 'scratch operand']
  #allocation4 [shape = 'f32[8,8]{1,0:T(8,128)}', space=vmem, size = 0x1000, scoped, tag = 'scratch operand']
  #allocation5 [shape = 'f32[8,8]{1,0:T(8,128)}', space=vmem, size = 0x1000, scoped, tag = 'scratch operand']
  #allocation6 [shape = 'f32[1,1]{1,0:T(1,128)S(1)}', space=vmem, size = 0x200, scoped, tag = 'scoped memory for batch_all_triplet_loss.1']
  %s0 = inlined_call_operand.vmem [shape: f32[8,32], index: 0, kind: input, shape index: {}]
  %s1 = inlined_call_operand.vmem [shape: s32[8,1], index: 1, kind: input, shape index: {}]
  %s2 = inlined_call_operand.vmem [shape: s32[1,8], index: 2, kind: input, shape index: {}]
  %s3 = inlined_call_operand.<no memory space> [shape: f32[1,1], index: 3, kind: input, shape index: {}]
  %s4 = inlined_call_operand.hbm [shape: f32[1,1], index: 4, kind: output, shape index: {}]
  %s5 = sld [smem:[#allocation0]]
  $region34: #{batch_all_triplet_loss.1} parent=0
    _
  %s7 = ssub.s32 1, %s5
  %s8 = scalar_select 0, %s7, %s5
  %v9 = vstv %s3
  %10 = vst [vmem:[#allocation6] sm:$0x1] %v9
  $region1: #{batch_all_triplet_loss.1} parent=0
    #allocation7 [shape = 'u8[512]{0}', space=vmem, size = 0x400, scoped, tag = 'output window, operand 0, single buffered']
    #allocation8 [shape = 's32[1]{0}', space=sflag, size = 0x4, scoped, tag = 'scoped memory for batch_all_triplet_loss.1']
    %11 = vsyncpa [#allocation8], 0
    // Predicated region
    $region2: #{batch_all_triplet_loss.1} parent=1 // pred_check
      _
    $region3: #{batch_all_triplet_loss.1} parent=1 // pred_check_branch
      %13 = sbr.rel (0) target = $region5
    $region4: #{batch_all_triplet_loss.1} parent=1 // pred_region
      _
    $region5: #{batch_all_triplet_loss.1} parent=1 // pred_fallthru
      _
    // Predicated region
    $region6: #{batch_all_triplet_loss.1} parent=1 // pred_check
      _
    $region7: #{batch_all_triplet_loss.1} parent=1 // pred_check_branch
      %15 = sbr.rel (0) target = $region9
    $region8: #{batch_all_triplet_loss.1} parent=1 // pred_region
      _
    $region9: #{batch_all_triplet_loss.1} parent=1 // pred_fallthru
      _
    // Predicated region
    $region10: #{batch_all_triplet_loss.1} parent=1 // pred_check
      _
    $region11: #{batch_all_triplet_loss.1} parent=1 // pred_check_branch
      %17 = sbr.rel (0) target = $region13
    $region12: #{batch_all_triplet_loss.1} parent=1 // pred_region
      _
    $region13: #{batch_all_triplet_loss.1} parent=1 // pred_fallthru
      _
    // Predicated region
    $region14: #{batch_all_triplet_loss.1} parent=1 // pred_check
      _
    $region15: #{batch_all_triplet_loss.1} parent=1 // pred_check_branch
      %19 = sbr.rel (0) target = $region17
    $region16: #{batch_all_triplet_loss.1} parent=1 // pred_region
      _
    $region17: #{batch_all_triplet_loss.1} parent=1 // pred_fallthru
      _
    %p20 = scmp.eq.s32.totalorder 0, 0
    // Predicated region
    $region18: #{batch_all_triplet_loss.1} parent=1 // pred_check
      %p21 = pneg %p20
    $region19: #{batch_all_triplet_loss.1} parent=1 // pred_check_branch
      %23 = sbr.rel (%p21) target = $region21
    $region20: #{batch_all_triplet_loss.1} parent=1 // pred_region
      %v24 = vld [vmem:[#allocation6] sm:$0x1]
      %v25 = vld [vmem:[%s0] sm:$0xff]
      %v26 = vmul.f32 %v25, %v25
      %vm27 = vcmask 261120
      %v28 = vsel %vm27, %v26, 0.0
      %29 = vadd.xlane.f32.xlu0 %v28
      %v30 = vpop.xlane.xlu0 %29
      %v31 = vmax.f32 %v30, 1e-08
      %v32 = vrsqrt.pop %v31
      %v33 = vmul.f32 %v25, %v32
      %v35 = vsel %vm27, %v33, 0
      %37 = vmatprep.subr.mxu0 0.0
      %38 = vmatpush1.xpose.msra.mxu0 %v35
      %39 = vmatprep.subr.mxu0 0.0
      %40 = vmatpush1.xpose.msra.mxu0 0.0
      %41 = vmatprep.subr.mxu0 0.0
      %42 = vmatpush1.xpose.msra.mxu0 0.0
      %43 = vmatprep.subr.mxu0 0.0
      %44 = vmatpush1.xpose.msra.mxu0 0.0
      %45 = vmatprep.subr.mxu0 0.0
      %46 = vmatpush1.xpose.msra.mxu0 0.0
      %47 = vmatprep.subr.mxu0 0.0
      %48 = vmatpush1.xpose.msra.mxu0 0.0
      %49 = vmatprep.subr.mxu0 0.0
      %50 = vmatpush1.xpose.msra.mxu0 0.0
      %51 = vmatprep.subr.mxu0 0.0
      %52 = vmatpush1.xpose.msra.mxu0 0.0
      %53 = vmatprep.subr.mxu0 0.0
      %54 = vmatpush1.xpose.msra.mxu0 0.0
      %55 = vmatprep.subr.mxu0 0.0
      %56 = vmatpush1.xpose.msra.mxu0 0.0
      %57 = vmatprep.subr.mxu0 0.0
      %58 = vmatpush1.xpose.msra.mxu0 0.0
      %59 = vmatprep.subr.mxu0 0.0
      %60 = vmatpush1.xpose.msra.mxu0 0.0
      %61 = vmatprep.subr.mxu0 0.0
      %62 = vmatpush1.xpose.msra.mxu0 0.0
      %63 = vmatprep.subr.mxu0 0.0
      %64 = vmatpush1.xpose.msra.mxu0 0.0
      %65 = vmatprep.subr.mxu0 0.0
      %66 = vmatpush1.xpose.msra.mxu0 0.0
      %67 = vmatprep.subr.mxu0 0.0
      %68 = vmatpush1.xpose.msra.mxu0 0.0
      %69 = vmatprep.subr.mxu0 0.0
      %70 = vmatpush1.xpose.msra.mxu0 0.0
      %71 = vmatprep.subr.mxu0 0.0
      %72 = vmatpush1.xpose.msra.mxu0 0.0
      %73 = vmatprep.subr.mxu0 0.0
      %74 = vmatpush1.xpose.msra.mxu0 0.0
      %75 = vmatprep.subr.mxu0 0.0
      %76 = vmatpush1.xpose.msra.mxu0 0.0
      %77 = vmatprep.subr.mxu0 0.0
      %78 = vmatpush1.xpose.msra.mxu0 0.0
      %79 = vmatprep.subr.mxu0 0.0
      %80 = vmatpush1.xpose.msra.mxu0 0.0
      %81 = vmatprep.subr.mxu0 0.0
      %82 = vmatpush1.xpose.msra.mxu0 0.0
      %83 = vmatprep.subr.mxu0 0.0
      %84 = vmatpush1.xpose.msra.mxu0 0.0
      %85 = vmatprep.subr.mxu0 0.0
      %86 = vmatpush1.xpose.msra.mxu0 0.0
      %87 = vmatprep.subr.mxu0 0.0
      %88 = vmatpush1.xpose.msra.mxu0 0.0
      %89 = vmatprep.subr.mxu0 0.0
      %90 = vmatpush1.xpose.msra.mxu0 0.0
      %91 = vmatprep.subr.mxu0 0.0
      %92 = vmatpush1.xpose.msra.mxu0 0.0
      %93 = vmatprep.subr.mxu0 0.0
      %94 = vmatpush1.xpose.msra.mxu0 0.0
      %95 = vmatprep.subr.mxu0 0.0
      %96 = vmatpush1.xpose.msra.mxu0 0.0
      %97 = vmatprep.subr.mxu0 0.0
      %98 = vmatpush1.xpose.msra.mxu0 0.0
      %99 = vmatprep.subr.mxu0 0.0
      %100 = vmatpush1.xpose.msra.mxu0 0.0
      %101 = vmatprep.mubr.f32.mxu0 0.0
      %102 = vmatmul.mubr.f32.gmra.mrb[0].mxu0 %v35
      %v103 = vpop.f32.mrb[0].mxu0
      %v104 = vadd.f32 0.0, %v103
      %v105 = vpop.f32.mrb[0].mxu0
      %106 = vdwg.mxu0
      %v107 = vsub.f32 1.0, %v104
      %v108 = vld [vmem:[%s1] sm:$0xff]
      %v109 = vld [vmem:[%s2] sm:$0x1]
      %110 = vset.pattern.permute.xlu0 0
      %111 = vperm.xlu0 %110, %v108
      %v112 = vpop.permute.xlu0 %111
      %v113 = vlaneseq
      %v114 = vshrl.u32 %v113, 7
      %v115 = vsub.s32 0, %v114
      %v116 = vrot.slane %v109, %v115
      %vm117 = vcmp.eq.s32.totalorder %v112, %v116
      %v118 = vlaneseq
      %v119 = vshrl.u32 %v118, 7
      %v120 = vlaneseq
      %v121 = vand.u32 %v120, 127
      %vm122 = vcmp.ne.s32.totalorder %v119, %v121
      %vm123 = vmand %vm117, %vm122
      %v125 = vlaneseq
      %v126 = vshrl.u32 %v125, 7
      %v127 = vsub.s32 0, %v126
      %v128 = vrot.slane %v24, %v127
      %129 = vset.pattern.permute.xlu0 0
      %130 = vperm.xlu0 %129, %v128
      %v131 = vpop.permute.xlu0 %130
      %v133 = vadd.f32 %v107, %v131
      %v134 = vsel %vm123, %v133, -1e+09
      %vm135 = vcmask 64512
      %136 = vst.msk [vmem:[#allocation2] sm:$0xff] %vm135, %v134
      %v137 = vsel %vm117, 1e+09, %v107
      %138 = vst.msk [vmem:[#allocation3] sm:$0xff] %vm135, %v137
      %139 = vst.msk [vmem:[#allocation4] sm:$0xff] %vm135, 0.0
      %140 = vst.msk [vmem:[#allocation5] sm:$0xff] %vm135, 0.0
    $region21: #{batch_all_triplet_loss.1} parent=1 // pred_fallthru
      _
    %v141 = vld [vmem:[#allocation2] sm:$0xff]
    %s142 = smul.u32 0, 8
    %s143 = scalar_lea.vmem [#allocation3], %s142
    %v144 = vld [vmem:[%s143] sm:$0x1]
    %v145 = vlaneseq
    %v146 = vshrl.u32 %v145, 7
    %v147 = vsub.s32 0, %v146
    %v148 = vrot.slane %v144, %v147
    %v149 = vsub.f32 %v141, %v148
    %v150 = vmax.f32 %v149, 0.0
    %v151 = vld [vmem:[#allocation4] sm:$0xff]
    %v152 = vadd.f32 %v151, %v150
    %vm153 = vcmask 64512
    %154 = vst.msk [vmem:[#allocation4] sm:$0xff] %vm153, %v152
    %v155 = vld [vmem:[#allocation5] sm:$0xff]
    %vm156 = vcmp.gt.f32.partialorder %v150, 1e-08
    %v157 = vsel %vm156, 1, 0
    %v158 = vcvt.s32.f32 %v157
    %v159 = vadd.f32 %v155, %v158
    %160 = vst.msk [vmem:[#allocation5] sm:$0xff] %vm153, %v159
    %s161 = sadd.s32 %s142, 1
    %s162 = scalar_lea.vmem [#allocation3], %s161
    %v163 = vld [vmem:[%s162] sm:$0x1]
    %v164 = vlaneseq
    %v165 = vshrl.u32 %v164, 7
    %v166 = vsub.s32 0, %v165
    %v167 = vrot.slane %v163, %v166
    %v168 = vsub.f32 %v141, %v167
    %v169 = vmax.f32 %v168, 0.0
    %v170 = vld [vmem:[#allocation4] sm:$0xff]
    %v171 = vadd.f32 %v170, %v169
    %172 = vst.msk [vmem:[#allocation4] sm:$0xff] %vm153, %v171
    %v173 = vld [vmem:[#allocation5] sm:$0xff]
    %vm174 = vcmp.gt.f32.partialorder %v169, 1e-08
    %v175 = vsel %vm174, 1, 0
    %v176 = vcvt.s32.f32 %v175
    %v177 = vadd.f32 %v173, %v176
    %178 = vst.msk [vmem:[#allocation5] sm:$0xff] %vm153, %v177
    %s179 = sadd.s32 %s142, 2
    %s180 = scalar_lea.vmem [#allocation3], %s179
    %v181 = vld [vmem:[%s180] sm:$0x1]
    %v182 = vlaneseq
    %v183 = vshrl.u32 %v182, 7
    %v184 = vsub.s32 0, %v183
    %v185 = vrot.slane %v181, %v184
    %v186 = vsub.f32 %v141, %v185
    %v187 = vmax.f32 %v186, 0.0
    %v188 = vld [vmem:[#allocation4] sm:$0xff]
    %v189 = vadd.f32 %v188, %v187
    %190 = vst.msk [vmem:[#allocation4] sm:$0xff] %vm153, %v189
    %v191 = vld [vmem:[#allocation5] sm:$0xff]
    %vm192 = vcmp.gt.f32.partialorder %v187, 1e-08
    %v193 = vsel %vm192, 1, 0
    %v194 = vcvt.s32.f32 %v193
    %v195 = vadd.f32 %v191, %v194
    %196 = vst.msk [vmem:[#allocation5] sm:$0xff] %vm153, %v195
    %s197 = sadd.s32 %s142, 3
    %s198 = scalar_lea.vmem [#allocation3], %s197
    %v199 = vld [vmem:[%s198] sm:$0x1]
    %v200 = vlaneseq
    %v201 = vshrl.u32 %v200, 7
    %v202 = vsub.s32 0, %v201
    %v203 = vrot.slane %v199, %v202
    %v204 = vsub.f32 %v141, %v203
    %v205 = vmax.f32 %v204, 0.0
    %v206 = vld [vmem:[#allocation4] sm:$0xff]
    %v207 = vadd.f32 %v206, %v205
    %208 = vst.msk [vmem:[#allocation4] sm:$0xff] %vm153, %v207
    %v209 = vld [vmem:[#allocation5] sm:$0xff]
    %vm210 = vcmp.gt.f32.partialorder %v205, 1e-08
    %v211 = vsel %vm210, 1, 0
    %v212 = vcvt.s32.f32 %v211
    %v213 = vadd.f32 %v209, %v212
    %214 = vst.msk [vmem:[#allocation5] sm:$0xff] %vm153, %v213
    %s215 = sadd.s32 %s142, 4
    %s216 = scalar_lea.vmem [#allocation3], %s215
    %v217 = vld [vmem:[%s216] sm:$0x1]
    %v218 = vlaneseq
    %v219 = vshrl.u32 %v218, 7
    %v220 = vsub.s32 0, %v219
    %v221 = vrot.slane %v217, %v220
    %v222 = vsub.f32 %v141, %v221
    %v223 = vmax.f32 %v222, 0.0
    %v224 = vld [vmem:[#allocation4] sm:$0xff]
    %v225 = vadd.f32 %v224, %v223
    %226 = vst.msk [vmem:[#allocation4] sm:$0xff] %vm153, %v225
    %v227 = vld [vmem:[#allocation5] sm:$0xff]
    %vm228 = vcmp.gt.f32.partialorder %v223, 1e-08
    %v229 = vsel %vm228, 1, 0
    %v230 = vcvt.s32.f32 %v229
    %v231 = vadd.f32 %v227, %v230
    %232 = vst.msk [vmem:[#allocation5] sm:$0xff] %vm153, %v231
    %s233 = sadd.s32 %s142, 5
    %s234 = scalar_lea.vmem [#allocation3], %s233
    %v235 = vld [vmem:[%s234] sm:$0x1]
    %v236 = vlaneseq
    %v237 = vshrl.u32 %v236, 7
    %v238 = vsub.s32 0, %v237
    %v239 = vrot.slane %v235, %v238
    %v240 = vsub.f32 %v141, %v239
    %v241 = vmax.f32 %v240, 0.0
    %v242 = vld [vmem:[#allocation4] sm:$0xff]
    %v243 = vadd.f32 %v242, %v241
    %244 = vst.msk [vmem:[#allocation4] sm:$0xff] %vm153, %v243
    %v245 = vld [vmem:[#allocation5] sm:$0xff]
    %vm246 = vcmp.gt.f32.partialorder %v241, 1e-08
    %v247 = vsel %vm246, 1, 0
    %v248 = vcvt.s32.f32 %v247
    %v249 = vadd.f32 %v245, %v248
    %250 = vst.msk [vmem:[#allocation5] sm:$0xff] %vm153, %v249
    %s251 = sadd.s32 %s142, 6
    %s252 = scalar_lea.vmem [#allocation3], %s251
    %v253 = vld [vmem:[%s252] sm:$0x1]
    %v254 = vlaneseq
    %v255 = vshrl.u32 %v254, 7
    %v256 = vsub.s32 0, %v255
    %v257 = vrot.slane %v253, %v256
    %v258 = vsub.f32 %v141, %v257
    %v259 = vmax.f32 %v258, 0.0
    %v260 = vld [vmem:[#allocation4] sm:$0xff]
    %v261 = vadd.f32 %v260, %v259
    %262 = vst.msk [vmem:[#allocation4] sm:$0xff] %vm153, %v261
    %v263 = vld [vmem:[#allocation5] sm:$0xff]
    %vm264 = vcmp.gt.f32.partialorder %v259, 1e-08
    %v265 = vsel %vm264, 1, 0
    %v266 = vcvt.s32.f32 %v265
    %v267 = vadd.f32 %v263, %v266
    %268 = vst.msk [vmem:[#allocation5] sm:$0xff] %vm153, %v267
    %s269 = sadd.s32 %s142, 7
    %s270 = scalar_lea.vmem [#allocation3], %s269
    %v271 = vld [vmem:[%s270] sm:$0x1]
    %v272 = vlaneseq
    %v273 = vshrl.u32 %v272, 7
    %v274 = vsub.s32 0, %v273
    %v275 = vrot.slane %v271, %v274
    %v276 = vsub.f32 %v141, %v275
    %v277 = vmax.f32 %v276, 0.0
    %v278 = vld [vmem:[#allocation4] sm:$0xff]
    %v279 = vadd.f32 %v278, %v277
    %280 = vst.msk [vmem:[#allocation4] sm:$0xff] %vm153, %v279
    %v281 = vld [vmem:[#allocation5] sm:$0xff]
    %vm282 = vcmp.gt.f32.partialorder %v277, 1e-08
    %v283 = vsel %vm282, 1, 0
    %v284 = vcvt.s32.f32 %v283
    %v285 = vadd.f32 %v281, %v284
    %286 = vst.msk [vmem:[#allocation5] sm:$0xff] %vm153, %v285
    // Predicated region
    $region22: #{batch_all_triplet_loss.1} parent=1 // pred_check
      %p287 = pneg %p20
    $region23: #{batch_all_triplet_loss.1} parent=1 // pred_check_branch
      %289 = sbr.rel (%p287) target = $region25
    $region24: #{batch_all_triplet_loss.1} parent=1 // pred_region
      %v290 = vld [vmem:[#allocation4] sm:$0xff]
      %v291 = vsel %vm153, %v290, 0.0
      %292 = vadd.xlane.f32.xlu0 %v291
      %v293 = vpop.xlane.xlu0 %292
      %v294 = vrot.slane %v293, 4
      %v295 = vadd.f32 %v293, %v294
      %v296 = vrot.slane %v295, 2
      %v297 = vadd.f32 %v295, %v296
      %v298 = vrot.slane %v297, 1
      %v299 = vadd.f32 %v297, %v298
      %s300 = vtos %v299
      %v301 = vstv %s300
      %v302 = vld [vmem:[#allocation5] sm:$0xff]
      %v303 = vsel %vm153, %v302, 0.0
      %304 = vadd.xlane.f32.xlu0 %v303
      %v305 = vpop.xlane.xlu0 %304
      %v306 = vrot.slane %v305, 4
      %v307 = vadd.f32 %v305, %v306
      %v308 = vrot.slane %v307, 2
      %v309 = vadd.f32 %v307, %v308
      %v310 = vrot.slane %v309, 1
      %v311 = vadd.f32 %v309, %v310
      %s312 = vtos %v311
      %v313 = vstv %s312
      %v314 = vadd.f32 %v313, 1e-08
      %v315 = vrcp.pop %v314
      %v316 = vmul.f32 %v301, %v315
      %vm317 = vcmask 0
      %318 = vst.msk [vmem:[#allocation7] sm:$0x1] %vm317, %v316
    $region25: #{batch_all_triplet_loss.1} parent=1 // pred_fallthru
      _
    // Predicated region
    $region26: #{batch_all_triplet_loss.1} parent=1 // pred_check
      _
    $region27: #{batch_all_triplet_loss.1} parent=1 // pred_check_branch
      %320 = sbr.rel (0) target = $region29
    $region28: #{batch_all_triplet_loss.1} parent=1 // pred_region
      %s322 = ssub.s32 16, 16
      %323 = vsyncadd [#allocation8], %s322
      %s325 = sshll.u32 [#allocation7], 4
      %s326 = int_to_ptr.vmem [resolvable:$true] %s325
      %328 = dma.vmem_to_hbm [thread:$0]  %s326, 16, %s4, [#allocation8]
    $region29: #{batch_all_triplet_loss.1} parent=1 // pred_fallthru
      _
    // Predicated region
    $region30: #{batch_all_triplet_loss.1} parent=1 // pred_check
      _
    $region31: #{batch_all_triplet_loss.1} parent=1 // pred_check_branch
      %330 = sbr.rel (0) target = $region33
    $region32: #{batch_all_triplet_loss.1} parent=1 // pred_region
      %331 = dma.done [#allocation8], 16
    $region33: #{batch_all_triplet_loss.1} parent=1 // pred_fallthru
      _
    %332 = vsyncpa [#allocation8], 1

</llo_original>
